<compile_context>
chip_gen: v7x
topology: tpu7x:2x2x1
jax: 0.10.0
libtpu: 0.0.40
codegen_flags: <defaults>
</compile_context>

<pallas_src>
import jax
import jax.numpy as jnp
from jax.experimental import pallas as pl
from jax.experimental.pallas import tpu as pltpu

EPS = 1e-5


# ----------------------------------------------------------------------------
# Generation-aware VMEM limit.
# ----------------------------------------------------------------------------
def _vmem_limit_bytes():
    cap = 64 * 1024 * 1024
    try:
        info_fn = getattr(pltpu, "get_tpu_info", None)
        if info_fn is not None:
            cap = int(info_fn().vmem_capacity_bytes)
    except Exception:
        pass
    # ~48 MiB on v7x (64 MiB physical), ~96 MiB on v5e/v6e (128 MiB physical)
    return int(min(cap * 3 // 4, 100 * 1024 * 1024))


# ----------------------------------------------------------------------------
# BN folding from (sum, sum-of-squares) statistics -- tiny glue.
# ----------------------------------------------------------------------------
def _fold(sum_c, sumsq_c, count, gamma, beta):
    mean = sum_c / count
    var = jnp.maximum(sumsq_c / count - mean * mean, 0.0)   # clamp cancellation
    scale = gamma / jnp.sqrt(var + EPS)
    shift = beta - mean * scale
    return scale, shift


def _array_moments(x):
    x32 = x.astype(jnp.float32)
    return jnp.sum(x32, axis=(0, 1, 2)), jnp.sum(x32 * x32, axis=(0, 1, 2))


def _pack_conv_weight(w, dtype):
    """(3,3,Cin,Cout) -> (3, 3*Cin, Cout): dx folded into the contraction."""
    kh, kw, cin, cout = w.shape
    return w.astype(dtype).reshape(kh, kw * cin, cout)


# ----------------------------------------------------------------------------
# Shared in-kernel helpers.
# ----------------------------------------------------------------------------
def _bn_relu_pack(x_ref, s_ref, b_ref, shift_ref):
    """BN-affine + ReLU (f32), then write the dx-shifted, zero-padded copies
    of the activation into ONE channel-packed VMEM scratch:
        shift_ref[r, w, dx*Cin:(dx+1)*Cin] = a_pad[r, w + dx]
    with a_pad the (H+2, W+2) zero-padded activation.  Only the thin zero
    borders are (re)written; the interior is fully overwritten each step."""
    _, H, W, Cin = x_ref.shape
    cdt = shift_ref.dtype
    a = jnp.maximum(x_ref[0].astype(jnp.float32) * s_ref[...] + b_ref[...],
                    0.0).astype(cdt)

    zrow = jnp.zeros((1, W, 3 * Cin), cdt)
    zcol = jnp.zeros((H, 1, Cin), cdt)
    shift_ref[0:1, :, :] = zrow
    shift_ref[H + 1:H + 2, :, :] = zrow
    # dx = 0 : a_pad[r, w]     -> left zero column, activation shifted right
    shift_ref[1:H + 1, 0:1, 0:Cin] = zcol
    shift_ref[1:H + 1, 1:W, 0:Cin] = a[:, :W - 1, :]
    # dx = 1 : a_pad[r, w + 1] -> the activation itself
    shift_ref[1:H + 1, :, Cin:2 * Cin] = a
    # dx = 2 : a_pad[r, w + 2] -> activation shifted left, right zero column
    shift_ref[1:H + 1, :W - 1, 2 * Cin:3 * Cin] = a[:, 1:, :]
    shift_ref[1:H + 1, W - 1:W, 2 * Cin:3 * Cin] = zcol


def _conv3x3(w_ref, shift_ref):
    """3 dy-dots with K = 3*Cin (dx folded into the contraction)."""
    H = shift_ref.shape[0] - 2
    W = shift_ref.shape[1]
    K = shift_ref.shape[2]

    def tap(dy):
        # free view when W is a multiple of 8 sublanes (true at these shapes)
        return shift_ref[dy:dy + H, :, :].reshape(H * W, K)

    y = jnp.dot(tap(0), w_ref[0], preferred_element_type=jnp.float32)
    y = y + jnp.dot(tap(1), w_ref[1], preferred_element_type=jnp.float32)
    y = y + jnp.dot(tap(2), w_ref[2], preferred_element_type=jnp.float32)
    return y                                             # (H*W, Cout) f32


def _emit_stats(y, st_ref):
    """Per-image per-channel sum / sum-of-squares (feeds the next BN fold)."""
    st_ref[0, 0:1, :] = jnp.sum(y, axis=0, keepdims=True)
    st_ref[0, 1:2, :] = jnp.sum(y * y, axis=0, keepdims=True)


# ----------------------------------------------------------------------------
# Kernel 1: fused BN + ReLU + 3x3 conv (stride 1, pad 1), optional residual,
#           plus BN statistics of the produced activation.
# ----------------------------------------------------------------------------
def _conv_kernel(x_ref, s_ref, b_ref, w_ref, o_ref, st_ref, shift_ref):
    _bn_relu_pack(x_ref, s_ref, b_ref, shift_ref)
    y = _conv3x3(w_ref, shift_ref)
    _emit_stats(y, st_ref)
    o_ref[0] = y.astype(o_ref.dtype)


def _conv_res_kernel(x_ref, s_ref, b_ref, w_ref, res_ref, o_ref, st_ref,
                     shift_ref):
    _bn_relu_pack(x_ref, s_ref, b_ref, shift_ref)
    y = _conv3x3(w_ref, shift_ref) + res_ref[0].astype(jnp.float32)
    _emit_stats(y, st_ref)
    o_ref[0] = y.astype(o_ref.dtype)


def bn_relu_conv3x3(x, scale, shift, w_packed, residual=None, out_dtype=None):
    """x: (N,H,W,Cin) NHWC; w_packed: (3, 3*Cin, Cout); residual: (N,H,W,Cout).
    Returns (out (N,H,W,Cout), stats (N,2,Cout)) with stats[n] =
    [per-channel sum, sum-of-squares] of the produced activation."""
    N, H, W, Cin = x.shape
    Cout = w_packed.shape[2]
    cdt = w_packed.dtype
    out_dtype = x.dtype if out_dtype is None else out_dtype
    scale = scale.reshape(1, 1, Cin).astype(jnp.float32)
    shift = shift.reshape(1, 1, Cin).astype(jnp.float32)

    x_spec = pl.BlockSpec((1, H, W, Cin), lambda n: (n, 0, 0, 0))
    sb_spec = pl.BlockSpec((1, 1, Cin), lambda n: (0, 0, 0))
    w_spec = pl.BlockSpec((3, 3 * Cin, Cout), lambda n: (0, 0, 0))
    o_spec = pl.BlockSpec((1, H * W, Cout), lambda n: (n, 0, 0))
    st_spec = pl.BlockSpec((1, 2, Cout), lambda n: (n, 0, 0))

    if residual is None:
        kernel = _conv_kernel
        in_specs = [x_spec, sb_spec, sb_spec, w_spec]
        args = (x, scale, shift, w_packed)
    else:
        kernel = _conv_res_kernel
        res_spec = pl.BlockSpec((1, H * W, Cout), lambda n: (n, 0, 0))
        in_specs = [x_spec, sb_spec, sb_spec, w_spec, res_spec]
        args = (x, scale, shift, w_packed, residual.reshape(N, H * W, Cout))

    out, stats = pl.pallas_call(
        kernel,
        out_shape=(jax.ShapeDtypeStruct((N, H * W, Cout), out_dtype),
                   jax.ShapeDtypeStruct((N, 2, Cout), jnp.float32)),
        grid_spec=pltpu.PrefetchScalarGridSpec(
            num_scalar_prefetch=0,
            grid=(N,),
            in_specs=in_specs,
            out_specs=[o_spec, st_spec],
            scratch_shapes=[pltpu.VMEM((H + 2, W, 3 * Cin), cdt)]),
        compiler_params=pltpu.CompilerParams(
            dimension_semantics=("parallel",),
            vmem_limit_bytes=_vmem_limit_bytes()),
    )(*args)
    return out.reshape(N, H, W, Cout), stats


# ----------------------------------------------------------------------------
# Kernel 2: final layer's weight_layer2 + upsample shortcut, fused.
#   weight_layer2: BN + ReLU + ConvTranspose2d(3x3, stride 2, pad 1, out_pad 1)
#   shortcut:      BN + ReLU + ConvTranspose2d(1x1, stride 2, out_pad 1)
# Computed as 4 output phases out[2p+r, 2q+t] = phase[r][t][p, q], written as
# (N, H, 2, W, 2*Cout) so the interleave to (N, 2H, 2W, Cout) is a free
# reshape in glue.  Operands are channel-packed so each phase is 1-2 deep-K
# dots with no concatenation temporaries.
# ----------------------------------------------------------------------------
def _convt_fused_kernel(y1_ref, s2_ref, b2_ref, wa_ref, wb_ref,
                        x_ref, s3_ref, b3_ref, o_ref, shift_ref):
    _, H, W, Cin = y1_ref.shape
    Cout = wb_ref.shape[2]
    cdt = shift_ref.dtype

    a2 = jnp.maximum(y1_ref[0].astype(jnp.float32) * s2_ref[...] + b2_ref[...],
                     0.0).astype(cdt)
    a3 = jnp.maximum(x_ref[0].astype(jnp.float32) * s3_ref[...] + b3_ref[...],
                     0.0).astype(cdt)

    # channel-packed, end-padded scratch:
    #   shift_ref[r, w, 0:Cin]     = a2_pad[r, w + 1]   (dq = 1)
    #   shift_ref[r, w, Cin:2Cin]  = a2_pad[r, w]       (dq = 0)
    #   shift_ref[r, w, 2Cin:3Cin] = a3[r, w]           (rows 0..H-1 only)
    # with a2_pad zero-padded one row (bottom) / one column (right).
    shift_ref[H:H + 1, :, 0:2 * Cin] = jnp.zeros((1, W, 2 * Cin), cdt)
    shift_ref[0:H, W - 1:W, 0:Cin] = jnp.zeros((H, 1, Cin), cdt)
    shift_ref[0:H, :W - 1, 0:Cin] = a2[:, 1:, :]
    shift_ref[0:H, :, Cin:2 * Cin] = a2
    shift_ref[0:H, :, 2 * Cin:3 * Cin] = a3

    def op(r0, c0, k):
        # free view when W is a multiple of 8 sublanes (true at these shapes)
        return shift_ref[r0:r0 + H, :, c0:c0 + k].reshape(H * W, k)

    dot = lambda a, w: jnp.dot(a, w, preferred_element_type=jnp.float32)

    ph00 = dot(op(0, Cin, 2 * Cin), wa_ref[0])                     # [a_pq | a3]
    ph01 = dot(op(0, 0, 2 * Cin), wa_ref[1])                       # [a_pq1| a_pq]
    ph10 = dot(op(0, Cin, Cin), wb_ref[0]) + dot(op(1, Cin, Cin), wb_ref[1])
    ph11 = dot(op(0, 0, 2 * Cin), wa_ref[2]) + dot(op(1, 0, 2 * Cin), wa_ref[3])

    odt = o_ref.dtype
    o_ref[0, :, 0, :, 0:Cout] = ph00.reshape(H, W, Cout).astype(odt)
    o_ref[0, :, 0, :, Cout:2 * Cout] = ph01.reshape(H, W, Cout).astype(odt)
    o_ref[0, :, 1, :, 0:Cout] = ph10.reshape(H, W, Cout).astype(odt)
    o_ref[0, :, 1, :, Cout:2 * Cout] = ph11.reshape(H, W, Cout).astype(odt)


def fused_upsample_layer(y1, s2, b2, wt, x, s3, b3, wu, out_dtype=None):
    """wt: (3,3,Cin,Cout) HWIO transposed-conv weight; wu: (Cin,Cout) 1x1."""
    N, H, W, Cin = y1.shape
    Cout = wt.shape[3]
    cdt = wt.dtype
    out_dtype = x.dtype if out_dtype is None else out_dtype

    # per-phase weights pre-stacked along K, matching the operand channel
    # packing [dq=1 | dq=0 | a3] of the in-kernel shift buffer
    wa = jnp.stack([
        jnp.concatenate([wt[1, 1], wu], axis=0),        # ph00 : [a_pq | a3 ]
        jnp.concatenate([wt[1, 0], wt[1, 2]], axis=0),  # ph01 : [a_pq1| a_pq]
        jnp.concatenate([wt[2, 0], wt[2, 2]], axis=0),  # ph11a: [a_pq1| a_pq]
        jnp.concatenate([wt[0, 0], wt[0, 2]], axis=0),  # ph11b: [a_p1q1|a_p1q]
    ]).astype(cdt)                                       # (4, 2*Cin, Cout)
    wb = jnp.stack([wt[2, 1], wt[0, 1]]).astype(cdt)     # (2, Cin, Cout) ph10

    s2 = s2.reshape(1, 1, Cin).astype(jnp.float32)
    b2 = b2.reshape(1, 1, Cin).astype(jnp.float32)
    s3 = s3.reshape(1, 1, Cin).astype(jnp.float32)
    b3 = b3.reshape(1, 1, Cin).astype(jnp.float32)

    act_spec = pl.BlockSpec((1, H, W, Cin), lambda n: (n, 0, 0, 0))
    sb_spec = pl.BlockSpec((1, 1, Cin), lambda n: (0, 0, 0))

    out = pl.pallas_call(
        _convt_fused_kernel,
        out_shape=jax.ShapeDtypeStruct((N, H, 2, W, 2 * Cout), out_dtype),
        grid_spec=pltpu.PrefetchScalarGridSpec(
            num_scalar_prefetch=0,
            grid=(N,),
            in_specs=[act_spec, sb_spec, sb_spec,
                      pl.BlockSpec((4, 2 * Cin, Cout), lambda n: (0, 0, 0)),
                      pl.BlockSpec((2, Cin, Cout), lambda n: (0, 0, 0)),
                      act_spec, sb_spec, sb_spec],
            out_specs=pl.BlockSpec((1, H, 2, W, 2 * Cout),
                                   lambda n: (n, 0, 0, 0, 0)),
            scratch_shapes=[pltpu.VMEM((H + 1, W, 3 * Cin), cdt)]),
        compiler_params=pltpu.CompilerParams(
            dimension_semantics=("parallel",),
            vmem_limit_bytes=_vmem_limit_bytes()),
    )(y1, s2, b2, wa, wb, x, s3, b3)

    # free reshape: (N, H, 2, W, 2, Cout) -> (N, 2H, 2W, Cout)
    return out.reshape(N, 2 * H, 2 * W, Cout)


# ----------------------------------------------------------------------------
# Parameters + full block forward (matches DecoderResidualBlock.forward)
# ----------------------------------------------------------------------------
def init_params(key, hidden, out_ch, layers):
    params = []
    for i in range(layers):
        upsample = (i == layers - 1)
        oc = out_ch if upsample else hidden
        key, k0, k1, k2, k3, k4, k5 = jax.random.split(key, 7)
        p = dict(
            g1=1.0 + 0.1 * jax.random.normal(k0, (hidden,), jnp.float32),
            b1=0.1 * jax.random.normal(k1, (hidden,), jnp.float32),
            w1=0.1 * jax.random.normal(k2, (3, 3, hidden, hidden), jnp.float32),
            g2=1.0 + 0.1 * jax.random.normal(k3, (hidden,), jnp.float32),
            b2=0.1 * jax.random.normal(k4, (hidden,), jnp.float32),
            w2=0.1 * jax.random.normal(k5, (3, 3, hidden, oc), jnp.float32),
        )
        if upsample:
            key, ku0, ku1, ku2 = jax.random.split(key, 4)
            p.update(
                g3=1.0 + 0.1 * jax.random.normal(ku0, (hidden,), jnp.float32),
                b3=0.1 * jax.random.normal(ku1, (hidden,), jnp.float32),
                wu=0.1 * jax.random.normal(ku2, (hidden, oc), jnp.float32),
            )
        params.append(p)
    return params


def decoder_residual_block(x, params, compute_dtype=jnp.bfloat16):
    """x: (N, H, W, hidden) NHWC, f32.  Intermediate activations travel in
    compute_dtype (HBM + MXU operands); BN folding / stats / accumulation and
    the final output stay f32."""
    n_layers = len(params)
    N, H, W, _ = x.shape
    count = N * H * W
    final_dtype = x.dtype
    # stats of the block input (only un-fused statistics pass in the block)
    sum_c, sumsq_c = _array_moments(x)
    for i, p in enumerate(params):
        upsample = (i == n_layers - 1)
        s1, b1 = _fold(sum_c, sumsq_c, count, p["g1"], p["b1"])
        y1, y1_st = bn_relu_conv3x3(x, s1, b1,
                                    _pack_conv_weight(p["w1"], compute_dtype),
                                    out_dtype=compute_dtype)
        s2, b2 = _fold(y1_st[:, 0].sum(0), y1_st[:, 1].sum(0), count,
                       p["g2"], p["b2"])
        if not upsample:
            x, x_st = bn_relu_conv3x3(y1, s2, b2,
                                      _pack_conv_weight(p["w2"], compute_dtype),
                                      residual=x, out_dtype=compute_dtype)
            sum_c, sumsq_c = x_st[:, 0].sum(0), x_st[:, 1].sum(0)
        else:
            s3, b3 = _fold(sum_c, sumsq_c, count, p["g3"], p["b3"])
            x = fused_upsample_layer(y1, s2, b2, p["w2"].astype(compute_dtype),
                                     x, s3, b3, p["wu"].astype(compute_dtype),
                                     out_dtype=final_dtype)
    return x


# ----------------------------------------------------------------------------
# Pure-JAX f32 reference (same math, via lax convolutions) for verification.
# ----------------------------------------------------------------------------
def _bn_relu_ref(x, g, b):
    mean = jnp.mean(x, axis=(0, 1, 2))
    var = jnp.mean((x - mean) ** 2, axis=(0, 1, 2))
    return jnp.maximum((x - mean) / jnp.sqrt(var + EPS) * g + b, 0.0)


def decoder_residual_block_ref(x, params):
    dn = ("NHWC", "HWIO", "NHWC")
    n_layers = len(params)
    for i, p in enumerate(params):
        upsample = (i == n_layers - 1)
        a1 = _bn_relu_ref(x, p["g1"], p["b1"])
        y1 = jax.lax.conv_general_dilated(a1, p["w1"], (1, 1), "SAME",
                                          dimension_numbers=dn)
        a2 = _bn_relu_ref(y1, p["g2"], p["b2"])
        if not upsample:
            y2 = jax.lax.conv_general_dilated(a2, p["w2"], (1, 1), "SAME",
                                              dimension_numbers=dn)
            x = y2 + x
        else:
            wflip = p["w2"][::-1, ::-1, :, :]
            y2 = jax.lax.conv_general_dilated(a2, wflip, (1, 1),
                                              ((1, 2), (1, 2)),
                                              lhs_dilation=(2, 2),
                                              dimension_numbers=dn)
            a3 = _bn_relu_ref(x, p["g3"], p["b3"])
            idn = jax.lax.conv_general_dilated(a3, p["wu"][None, None],
                                               (1, 1), ((0, 1), (0, 1)),
                                               lhs_dilation=(2, 2),
                                               dimension_numbers=dn)
            x = y2 + idn
    return x


if __name__ == "__main__":
    key = jax.random.PRNGKey(0)
    kx, kp = jax.random.split(key)

    N, H, W = 2, 8, 8
    hidden_channels, output_channels, layers = 8, 8, 2

    # layout: x is NHWC; equivalent PyTorch input would be x.transpose(0,3,1,2)
    x = jax.random.normal(kx, (N, H, W, hidden_channels), jnp.float32)
    params = init_params(kp, hidden_channels, output_channels, layers)

    ref = decoder_residual_block_ref(x, params)

    # strict check: f32 MXU operands / f32 intermediate activations
    out32 = jax.block_until_ready(
        decoder_residual_block(x, params, compute_dtype=jnp.float32))
    assert out32.shape == (N, 2 * H, 2 * W, output_channels), out32.shape
    err32 = float(jnp.max(jnp.abs(out32 - ref)))
    assert err32 < 1e-3, f"f32 max abs error {err32}"

    # default fast path: bf16 weights / activations (f32 accumulation + BN)
    out16 = jax.block_until_ready(
        decoder_residual_block(x, params, compute_dtype=jnp.bfloat16))
    assert out16.shape == (N, 2 * H, 2 * W, output_channels), out16.shape
    err16 = float(jnp.max(jnp.abs(out16 - ref)))
    assert err16 < 1e-1, f"bf16 max abs error {err16}"

    print("KERNEL_OK")
</pallas_src>

<mosaic_0001>
module attributes {stable_mosaic.version = 11 : i64} {
  func.func @_conv_kernel(%arg0: i32, %arg1: memref<1x8x8x8xf32, #tpu.memory_space<vmem>>, %arg2: memref<1x1x8xf32, #tpu.memory_space<vmem>>, %arg3: memref<1x1x8xf32, #tpu.memory_space<vmem>>, %arg4: memref<3x24x8xf32, #tpu.memory_space<vmem>>, %arg5: memref<1x64x8xf32, #tpu.memory_space<vmem>>, %arg6: memref<1x2x8xf32, #tpu.memory_space<vmem>>, %arg7: memref<10x8x24xf32, #tpu.memory_space<vmem>>) attributes {dimension_semantics = [#tpu.dimension_semantics<parallel>], iteration_bounds = array<i64: 2>, scalar_prefetch = 0 : i64, scratch_operands = 1 : i64, tpu.core_type = #tpu.core_type<tc>, window_params = [{transform_indices = @transform_0, window_bounds = array<i64: 1, 8, 8, 8>}, {pipeline_mode = #tpu.pipeline_mode<synchronous>, transform_indices = @transform_1, window_bounds = array<i64: 1, 1, 8>}, {pipeline_mode = #tpu.pipeline_mode<synchronous>, transform_indices = @transform_2, window_bounds = array<i64: 1, 1, 8>}, {pipeline_mode = #tpu.pipeline_mode<synchronous>, transform_indices = @transform_3, window_bounds = array<i64: 3, 24, 8>}, {transform_indices = @transform_4, window_bounds = array<i64: 1, 64, 8>}, {transform_indices = @transform_5, window_bounds = array<i64: 1, 2, 8>}]} {
    %c0 = arith.constant 0 : index
    %c0_0 = arith.constant 0 : index
    %c0_1 = arith.constant 0 : index
    %c0_2 = arith.constant 0 : index
    %0 = vector.load %arg1[%c0, %c0_0, %c0_1, %c0_2] : memref<1x8x8x8xf32, #tpu.memory_space<vmem>>, vector<1x8x8x8xf32>
    %1 = vector.shape_cast %0 : vector<1x8x8x8xf32> to vector<8x8x8xf32>
    %c0_3 = arith.constant 0 : index
    %c0_4 = arith.constant 0 : index
    %c0_5 = arith.constant 0 : index
    %2 = vector.load %arg2[%c0_3, %c0_4, %c0_5] : memref<1x1x8xf32, #tpu.memory_space<vmem>>, vector<1x1x8xf32>
    %3 = vector.broadcast %2 : vector<1x1x8xf32> to vector<8x8x8xf32>
    %4 = arith.mulf %1, %3 : vector<8x8x8xf32>
    %c0_6 = arith.constant 0 : index
    %c0_7 = arith.constant 0 : index
    %c0_8 = arith.constant 0 : index
    %5 = vector.load %arg3[%c0_6, %c0_7, %c0_8] : memref<1x1x8xf32, #tpu.memory_space<vmem>>, vector<1x1x8xf32>
    %6 = vector.broadcast %5 : vector<1x1x8xf32> to vector<8x8x8xf32>
    %7 = arith.addf %4, %6 : vector<8x8x8xf32>
    %cst = arith.constant 0.000000e+00 : f32
    %8 = vector.broadcast %cst : f32 to vector<8x8x8xf32>
    %9 = arith.maximumf %7, %8 : vector<8x8x8xf32>
    %cst_9 = arith.constant 0.000000e+00 : f32
    %10 = vector.broadcast %cst_9 : f32 to vector<1x8x24xf32>
    %cst_10 = arith.constant 0.000000e+00 : f32
    %11 = vector.broadcast %cst_10 : f32 to vector<8x1x8xf32>
    %c0_11 = arith.constant 0 : index
    %c0_12 = arith.constant 0 : index
    %c0_13 = arith.constant 0 : index
    %12 = vector.load %arg7[%c0_11, %c0_12, %c0_13] : memref<10x8x24xf32, #tpu.memory_space<vmem>>, vector<1x8x24xf32>
    tpu.vector_store %arg7[%c0_11, %c0_12, %c0_13], %10 {strides = array<i32>} : memref<10x8x24xf32, #tpu.memory_space<vmem>>, vector<1x8x24xf32>,
    %c9 = arith.constant 9 : index
    %c0_14 = arith.constant 0 : index
    %c0_15 = arith.constant 0 : index
    %13 = vector.load %arg7[%c9, %c0_14, %c0_15] : memref<10x8x24xf32, #tpu.memory_space<vmem>>, vector<1x8x24xf32>
    tpu.vector_store %arg7[%c9, %c0_14, %c0_15], %10 {strides = array<i32>} : memref<10x8x24xf32, #tpu.memory_space<vmem>>, vector<1x8x24xf32>,
    %c1 = arith.constant 1 : index
    %c0_16 = arith.constant 0 : index
    %c0_17 = arith.constant 0 : index
    %14 = vector.load %arg7[%c1, %c0_16, %c0_17] : memref<10x8x24xf32, #tpu.memory_space<vmem>>, vector<8x1x8xf32>
    tpu.vector_store %arg7[%c1, %c0_16, %c0_17], %11 {strides = array<i32>} : memref<10x8x24xf32, #tpu.memory_space<vmem>>, vector<8x1x8xf32>,
    %15 = vector.extract_strided_slice %9 {offsets = [0, 0, 0], sizes = [8, 7, 8], strides = [1, 1, 1]} : vector<8x8x8xf32> to vector<8x7x8xf32>
    %c1_18 = arith.constant 1 : index
    %c1_19 = arith.constant 1 : index
    %c0_20 = arith.constant 0 : index
    %16 = vector.load %arg7[%c1_18, %c1_19, %c0_20] : memref<10x8x24xf32, #tpu.memory_space<vmem>>, vector<8x7x8xf32>
    tpu.vector_store %arg7[%c1_18, %c1_19, %c0_20], %15 {strides = array<i32>} : memref<10x8x24xf32, #tpu.memory_space<vmem>>, vector<8x7x8xf32>,
    %c1_21 = arith.constant 1 : index
    %c0_22 = arith.constant 0 : index
    %c8 = arith.constant 8 : index
    %17 = vector.load %arg7[%c1_21, %c0_22, %c8] : memref<10x8x24xf32, #tpu.memory_space<vmem>>, vector<8x8x8xf32>
    tpu.vector_store %arg7[%c1_21, %c0_22, %c8], %9 {strides = array<i32>} : memref<10x8x24xf32, #tpu.memory_space<vmem>>, vector<8x8x8xf32>,
    %18 = vector.extract_strided_slice %9 {offsets = [0, 1, 0], sizes = [8, 7, 8], strides = [1, 1, 1]} : vector<8x8x8xf32> to vector<8x7x8xf32>
    %c1_23 = arith.constant 1 : index
    %c0_24 = arith.constant 0 : index
    %c16 = arith.constant 16 : index
    %19 = vector.load %arg7[%c1_23, %c0_24, %c16] : memref<10x8x24xf32, #tpu.memory_space<vmem>>, vector<8x7x8xf32>
    tpu.vector_store %arg7[%c1_23, %c0_24, %c16], %18 {strides = array<i32>} : memref<10x8x24xf32, #tpu.memory_space<vmem>>, vector<8x7x8xf32>,
    %c1_25 = arith.constant 1 : index
    %c7 = arith.constant 7 : index
    %c16_26 = arith.constant 16 : index
    %20 = vector.load %arg7[%c1_25, %c7, %c16_26] : memref<10x8x24xf32, #tpu.memory_space<vmem>>, vector<8x1x8xf32>
    tpu.vector_store %arg7[%c1_25, %c7, %c16_26], %11 {strides = array<i32>} : memref<10x8x24xf32, #tpu.memory_space<vmem>>, vector<8x1x8xf32>,
    %c0_27 = arith.constant 0 : index
    %c0_28 = arith.constant 0 : index
    %c0_29 = arith.constant 0 : index
    %21 = vector.load %arg7[%c0_27, %c0_28, %c0_29] : memref<10x8x24xf32, #tpu.memory_space<vmem>>, vector<8x8x24xf32>
    %22 = vector.shape_cast %21 : vector<8x8x24xf32> to vector<64x24xf32>
    %c0_30 = arith.constant 0 : index
    %c0_31 = arith.constant 0 : index
    %c0_32 = arith.constant 0 : index
    %23 = vector.load %arg4[%c0_30, %c0_31, %c0_32] : memref<3x24x8xf32, #tpu.memory_space<vmem>>, vector<1x24x8xf32>
    %24 = vector.shape_cast %23 : vector<1x24x8xf32> to vector<24x8xf32>
    %cst_33 = arith.constant dense<0.000000e+00> : vector<64x8xf32>
    %25 = tpu.matmul %22, %24, %cst_33 {dimension_numbers = #tpu.dot_dimension_numbers<[1], [0], [0], [1], [0, 0, 1, 1], [], []>} : vector<64x24xf32>, vector<24x8xf32>, vector<64x8xf32> -> vector<64x8xf32>
    %c1_34 = arith.constant 1 : index
    %c0_35 = arith.constant 0 : index
    %c0_36 = arith.constant 0 : index
    %26 = vector.load %arg7[%c1_34, %c0_35, %c0_36] : memref<10x8x24xf32, #tpu.memory_space<vmem>>, vector<8x8x24xf32>
    %27 = vector.shape_cast %26 : vector<8x8x24xf32> to vector<64x24xf32>
    %c1_37 = arith.constant 1 : index
    %c0_38 = arith.constant 0 : index
    %c0_39 = arith.constant 0 : index
    %28 = vector.load %arg4[%c1_37, %c0_38, %c0_39] : memref<3x24x8xf32, #tpu.memory_space<vmem>>, vector<1x24x8xf32>
    %29 = vector.shape_cast %28 : vector<1x24x8xf32> to vector<24x8xf32>
    %cst_40 = arith.constant dense<0.000000e+00> : vector<64x8xf32>
    %30 = tpu.matmul %27, %29, %cst_40 {dimension_numbers = #tpu.dot_dimension_numbers<[1], [0], [0], [1], [0, 0, 1, 1], [], []>} : vector<64x24xf32>, vector<24x8xf32>, vector<64x8xf32> -> vector<64x8xf32>
    %31 = arith.addf %25, %30 : vector<64x8xf32>
    %c2 = arith.constant 2 : index
    %c0_41 = arith.constant 0 : index
    %c0_42 = arith.constant 0 : index
    %32 = vector.load %arg7[%c2, %c0_41, %c0_42] : memref<10x8x24xf32, #tpu.memory_space<vmem>>, vector<8x8x24xf32>
    %33 = vector.shape_cast %32 : vector<8x8x24xf32> to vector<64x24xf32>
    %c2_43 = arith.constant 2 : index
    %c0_44 = arith.constant 0 : index
    %c0_45 = arith.constant 0 : index
    %34 = vector.load %arg4[%c2_43, %c0_44, %c0_45] : memref<3x24x8xf32, #tpu.memory_space<vmem>>, vector<1x24x8xf32>
    %35 = vector.shape_cast %34 : vector<1x24x8xf32> to vector<24x8xf32>
    %cst_46 = arith.constant dense<0.000000e+00> : vector<64x8xf32>
    %36 = tpu.matmul %33, %35, %cst_46 {dimension_numbers = #tpu.dot_dimension_numbers<[1], [0], [0], [1], [0, 0, 1, 1], [], []>} : vector<64x24xf32>, vector<24x8xf32>, vector<64x8xf32> -> vector<64x8xf32>
    %37 = arith.addf %31, %36 : vector<64x8xf32>
    %cst_47 = arith.constant dense<0.000000e+00> : vector<8xf32>
    %38 = vector.multi_reduction <add>, %37, %cst_47 [0] : vector<64x8xf32> to vector<8xf32>
    %39 = vector.shape_cast %38 : vector<8xf32> to vector<1x8xf32>
    %c0_48 = arith.constant 0 : index
    %c0_49 = arith.constant 0 : index
    %c0_50 = arith.constant 0 : index
    %40 = vector.load %arg6[%c0_48, %c0_49, %c0_50] : memref<1x2x8xf32, #tpu.memory_space<vmem>>, vector<1x1x8xf32>
    %41 = vector.shape_cast %40 : vector<1x1x8xf32> to vector<1x8xf32>
    %42 = vector.shape_cast %39 : vector<1x8xf32> to vector<1x1x8xf32>
    tpu.vector_store %arg6[%c0_48, %c0_49, %c0_50], %42 {strides = array<i32>} : memref<1x2x8xf32, #tpu.memory_space<vmem>>, vector<1x1x8xf32>,
    %43 = arith.mulf %37, %37 : vector<64x8xf32>
    %cst_51 = arith.constant dense<0.000000e+00> : vector<8xf32>
    %44 = vector.multi_reduction <add>, %43, %cst_51 [0] : vector<64x8xf32> to vector<8xf32>
    %45 = vector.shape_cast %44 : vector<8xf32> to vector<1x8xf32>
    %c0_52 = arith.constant 0 : index
    %c1_53 = arith.constant 1 : index
    %c0_54 = arith.constant 0 : index
    %46 = vector.load %arg6[%c0_52, %c1_53, %c0_54] : memref<1x2x8xf32, #tpu.memory_space<vmem>>, vector<1x1x8xf32>
    %47 = vector.shape_cast %46 : vector<1x1x8xf32> to vector<1x8xf32>
    %48 = vector.shape_cast %45 : vector<1x8xf32> to vector<1x1x8xf32>
    tpu.vector_store %arg6[%c0_52, %c1_53, %c0_54], %48 {strides = array<i32>} : memref<1x2x8xf32, #tpu.memory_space<vmem>>, vector<1x1x8xf32>,
    %c0_55 = arith.constant 0 : index
    %c0_56 = arith.constant 0 : index
    %c0_57 = arith.constant 0 : index
    %49 = vector.load %arg5[%c0_55, %c0_56, %c0_57] : memref<1x64x8xf32, #tpu.memory_space<vmem>>, vector<1x64x8xf32>
    %50 = vector.shape_cast %49 : vector<1x64x8xf32> to vector<64x8xf32>
    %51 = vector.shape_cast %37 : vector<64x8xf32> to vector<1x64x8xf32>
    tpu.vector_store %arg5[%c0_55, %c0_56, %c0_57], %51 {strides = array<i32>} : memref<1x64x8xf32, #tpu.memory_space<vmem>>, vector<1x64x8xf32>,
    return
  }
  func.func @transform_0(%arg0: i32) -> (i32, i32, i32, i32) {
    %c0_i32 = arith.constant 0 : i32
    %c0_i32_0 = arith.constant 0 : i32
    %c0_i32_1 = arith.constant 0 : i32
    %c0_i32_2 = arith.constant 0 : i32
    return %arg0, %c0_i32, %c0_i32_0, %c0_i32_1 : i32, i32, i32, i32
  }
  func.func @transform_1(%arg0: i32) -> (i32, i32, i32) {
    %c0_i32 = arith.constant 0 : i32
    %c0_i32_0 = arith.constant 0 : i32
    %c0_i32_1 = arith.constant 0 : i32
    %c0_i32_2 = arith.constant 0 : i32
    return %c0_i32, %c0_i32_0, %c0_i32_1 : i32, i32, i32
  }
  func.func @transform_2(%arg0: i32) -> (i32, i32, i32) {
    %c0_i32 = arith.constant 0 : i32
    %c0_i32_0 = arith.constant 0 : i32
    %c0_i32_1 = arith.constant 0 : i32
    %c0_i32_2 = arith.constant 0 : i32
    return %c0_i32, %c0_i32_0, %c0_i32_1 : i32, i32, i32
  }
  func.func @transform_3(%arg0: i32) -> (i32, i32, i32) {
    %c0_i32 = arith.constant 0 : i32
    %c0_i32_0 = arith.constant 0 : i32
    %c0_i32_1 = arith.constant 0 : i32
    %c0_i32_2 = arith.constant 0 : i32
    return %c0_i32, %c0_i32_0, %c0_i32_1 : i32, i32, i32
  }
  func.func @transform_4(%arg0: i32) -> (i32, i32, i32) {
    %c0_i32 = arith.constant 0 : i32
    %c0_i32_0 = arith.constant 0 : i32
    %c0_i32_1 = arith.constant 0 : i32
    return %arg0, %c0_i32, %c0_i32_0 : i32, i32, i32
  }
  func.func @transform_5(%arg0: i32) -> (i32, i32, i32) {
    %c0_i32 = arith.constant 0 : i32
    %c0_i32_0 = arith.constant 0 : i32
    %c0_i32_1 = arith.constant 0 : i32
    return %arg0, %c0_i32, %c0_i32_0 : i32, i32, i32
  }
}

</mosaic_0001>

<llo_original>
// kernel: tpu_custom_call.1
$region0: #{tpu_custom_call.1}
  #allocation0 [shape = 'u32[]', space=smem, size = 0x4, offset = 0x4, fixed_abs, tag = 'smem constant byte address 0x4 - core index']
  #allocation1 [shape = 'u32[144,128]{1,0:T(1,128)}', space=vmem, size = 0x12000, scoped, tag = 'internal scratch']
  #allocation2 [shape = 'f32[10,8,24]{2,1,0:T(8,128)}', space=vmem, size = 0xa000, scoped, tag = 'scratch operand']
  %s0 = inlined_call_operand.hbm [shape: f32[2,8,8,8], index: 0, kind: input, shape index: {}]
  %s1 = inlined_call_operand.vmem [shape: f32[1,1,8], index: 1, kind: input, shape index: {}]
  %s2 = inlined_call_operand.vmem [shape: f32[1,1,8], index: 2, kind: input, shape index: {}]
  %s3 = inlined_call_operand.vmem [shape: f32[3,24,8], index: 3, kind: input, shape index: {}]
  %s4 = inlined_call_operand.vmem [shape: f32[2,64,8], index: 4, kind: output, shape index: {0}]
  %s5 = inlined_call_operand.hbm [shape: f32[2,2,8], index: 5, kind: output, shape index: {1}]
  %6 = xla_tuple %s4, %s5
  %s7 = sld [smem:[#allocation0]]
  $region61: #{tpu_custom_call.1} parent=0
    _
  %s9 = ssub.s32 1, %s7
  %s10 = scalar_select 0, %s9, %s7
  $region1: #{tpu_custom_call.1} parent=0
    #allocation3 [shape = 'u8[65536]{0}', space=vmem, size = 0x10000, scoped, tag = 'input window, operand 0']
    #allocation4 [shape = 's32[2]{0}', space=sflag, size = 0x8, scoped, tag = 'scoped memory for tpu_custom_call.1']
    #allocation5 [shape = 's32[2]{0}', space=sflag, size = 0x8, scoped, tag = 'scoped memory for tpu_custom_call.1']
    #allocation6 [shape = 'u8[2048]{0}', space=vmem, size = 0x800, scoped, tag = 'output window, operand 1']
    %11 = vsyncpa [#allocation4], 0
    %s12 = scalar_lea.sflag [#allocation4], 1
    %13 = vsyncpa %s12, 0
    %14 = vsyncpa [#allocation5], 0
    %s15 = scalar_lea.sflag [#allocation5], 1
    %16 = vsyncpa %s15, 0
    loop: start=0, step=1, limit=4
    $region2: #{tpu_custom_call.1} parent=1 // loop_pre_header
      _
    $region3: #{tpu_custom_call.1} parent=1 // loop_header
      %s18 = sphi 0, %s22
      %p19 = scmp.ge.s32.totalorder %s18, 4
      %s28 = sphi 0, %s30
      %s31 = sphi 0, %s28
      %s32 = sphi 0, %s31
      %s48 = sphi 0, %s32
      %s52 = sphi 0, %s52
      %s54 = sphi 0, %s52
      %s55 = sphi 0, %s54
      %s69 = sphi 0, %s55
      %s73 = sphi 0, %s73
      %s75 = sphi 0, %s73
      %s76 = sphi 0, %s75
      %s90 = sphi 0, %s76
      %s94 = sphi 0, %s94
      %s96 = sphi 0, %s94
      %s97 = sphi 0, %s96
      %s111 = sphi 0, %s97
      %s117 = sphi 0, %s119
      %s120 = sphi 0, %s117
      %s121 = sphi 0, %s120
      %s137 = sphi 0, %s121
      %s143 = sphi 0, %s145
      %s146 = sphi 0, %s143
      %s147 = sphi 0, %s146
      %s163 = sphi 0, %s147
    $region4: #{tpu_custom_call.1} parent=1 // loop_header_branch
      %21 = sbr.rel (%p19) target = $region8
    $region5: #{tpu_custom_call.1} parent=1 // loop_body
      %s23 = ssub.s32 %s18, 1
      %s24 = ssub.s32 %s18, 2
      %s25 = sadd.s32 %s18, 1
      %s26 = ssub.s32 %s18, %s25
      %p27 = scmp.eq.s32.totalorder %s26, 0
      %s29 = sadd.s32 %s28, 1
      %s30 = scalar_select %p27, %s28, %s29
      %p33 = pneg %p27
      %p34 = scmp.eq.s32.totalorder %s18, 1
      %p35 = por %p33, %p34
      %p36 = scmp.ne.s32.totalorder %s28, %s31
      %p37 = scmp.eq.s32.totalorder %s18, 0
      %p38 = por %p36, %p37
      %p39 = scmp.ne.s32.totalorder %s28, %s31
      %p40 = scmp.eq.s32.totalorder %s23, 1
      %p41 = por %p39, %p40
      %p42 = scmp.ne.s32.totalorder %s31, %s32
      %p43 = scmp.eq.s32.totalorder %s23, 0
      %p44 = por %p42, %p43
      %p45 = scmp.ne.s32.totalorder %s31, %s32
      %p46 = scmp.eq.s32.totalorder %s24, 1
      %p47 = por %p45, %p46
      %p49 = scmp.ne.s32.totalorder %s32, %s48
      %p50 = scmp.eq.s32.totalorder %s24, 0
      %p51 = por %p49, %p50
      %s53 = sadd.s32 %s52, 1
      %p56 = scmp.eq.s32.totalorder %s18, 1
      %p57 = scmp.ne.s32.totalorder %s52, %s54
      %p58 = scmp.eq.s32.totalorder %s18, 0
      %p59 = por %p57, %p58
      %p60 = scmp.ne.s32.totalorder %s52, %s54
      %p61 = scmp.eq.s32.totalorder %s23, 1
      %p62 = por %p60, %p61
      %p63 = scmp.ne.s32.totalorder %s54, %s55
      %p64 = scmp.eq.s32.totalorder %s23, 0
      %p65 = por %p63, %p64
      %p66 = scmp.ne.s32.totalorder %s54, %s55
      %p67 = scmp.eq.s32.totalorder %s24, 1
      %p68 = por %p66, %p67
      %p70 = scmp.ne.s32.totalorder %s55, %s69
      %p71 = scmp.eq.s32.totalorder %s24, 0
      %p72 = por %p70, %p71
      %s74 = sadd.s32 %s73, 1
      %p77 = scmp.eq.s32.totalorder %s18, 1
      %p78 = scmp.ne.s32.totalorder %s73, %s75
      %p79 = scmp.eq.s32.totalorder %s18, 0
      %p80 = por %p78, %p79
      %p81 = scmp.ne.s32.totalorder %s73, %s75
      %p82 = scmp.eq.s32.totalorder %s23, 1
      %p83 = por %p81, %p82
      %p84 = scmp.ne.s32.totalorder %s75, %s76
      %p85 = scmp.eq.s32.totalorder %s23, 0
      %p86 = por %p84, %p85
      %p87 = scmp.ne.s32.totalorder %s75, %s76
      %p88 = scmp.eq.s32.totalorder %s24, 1
      %p89 = por %p87, %p88
      %p91 = scmp.ne.s32.totalorder %s76, %s90
      %p92 = scmp.eq.s32.totalorder %s24, 0
      %p93 = por %p91, %p92
      %s95 = sadd.s32 %s94, 1
      %p98 = scmp.eq.s32.totalorder %s18, 1
      %p99 = scmp.ne.s32.totalorder %s94, %s96
      %p100 = scmp.eq.s32.totalorder %s18, 0
      %p101 = por %p99, %p100
      %p102 = scmp.ne.s32.totalorder %s94, %s96
      %p103 = scmp.eq.s32.totalorder %s23, 1
      %p104 = por %p102, %p103
      %p105 = scmp.ne.s32.totalorder %s96, %s97
      %p106 = scmp.eq.s32.totalorder %s23, 0
      %p107 = por %p105, %p106
      %p108 = scmp.ne.s32.totalorder %s96, %s97
      %p109 = scmp.eq.s32.totalorder %s24, 1
      %p110 = por %p108, %p109
      %p112 = scmp.ne.s32.totalorder %s97, %s111
      %p113 = scmp.eq.s32.totalorder %s24, 0
      %p114 = por %p112, %p113
      %s115 = ssub.s32 %s18, %s25
      %p116 = scmp.eq.s32.totalorder %s115, 0
      %s118 = sadd.s32 %s117, 1
      %s119 = scalar_select %p116, %s117, %s118
      %p122 = pneg %p116
      %p123 = scmp.eq.s32.totalorder %s18, 1
      %p124 = por %p122, %p123
      %p125 = scmp.ne.s32.totalorder %s117, %s120
      %p126 = scmp.eq.s32.totalorder %s18, 0
      %p127 = por %p125, %p126
      %p128 = scmp.ne.s32.totalorder %s117, %s120
      %p129 = scmp.eq.s32.totalorder %s23, 1
      %p130 = por %p128, %p129
      %p131 = scmp.ne.s32.totalorder %s120, %s121
      %p132 = scmp.eq.s32.totalorder %s23, 0
      %p133 = por %p131, %p132
      %p134 = scmp.ne.s32.totalorder %s120, %s121
      %p135 = scmp.eq.s32.totalorder %s24, 1
      %p136 = por %p134, %p135
      %p138 = scmp.ne.s32.totalorder %s121, %s137
      %p139 = scmp.eq.s32.totalorder %s24, 0
      %p140 = por %p138, %p139
      %s141 = ssub.s32 %s18, %s25
      %p142 = scmp.eq.s32.totalorder %s141, 0
      %s144 = sadd.s32 %s143, 1
      %s145 = scalar_select %p142, %s143, %s144
      %p148 = pneg %p142
      %p149 = scmp.eq.s32.totalorder %s18, 1
      %p150 = por %p148, %p149
      %p151 = scmp.ne.s32.totalorder %s143, %s146
      %p152 = scmp.eq.s32.totalorder %s18, 0
      %p153 = por %p151, %p152
      %p154 = scmp.ne.s32.totalorder %s143, %s146
      %p155 = scmp.eq.s32.totalorder %s23, 1
      %p156 = por %p154, %p155
      %p157 = scmp.ne.s32.totalorder %s146, %s147
      %p158 = scmp.eq.s32.totalorder %s23, 0
      %p159 = por %p157, %p158
      %p160 = scmp.ne.s32.totalorder %s146, %s147
      %p161 = scmp.eq.s32.totalorder %s24, 1
      %p162 = por %p160, %p161
      %p164 = scmp.ne.s32.totalorder %s147, %s163
      %p165 = scmp.eq.s32.totalorder %s24, 0
      %p166 = por %p164, %p165
      %p167 = scmp.le.s32.totalorder 1, %s18
      %p168 = scmp.lt.s32.totalorder %s18, 3
      %p169 = pnand %p167, %p168
      %p170 = pneg %p169
      // Predicated region
      $region9: #{tpu_custom_call.1} parent=5 // pred_check
        _
      $region10: #{tpu_custom_call.1} parent=5 // pred_check_branch
        %172 = sbr.rel (%p169) target = $region12
      $region11: #{tpu_custom_call.1} parent=5 // pred_region
        %s173 = ssub.s32 %s18, 1
        // Predicated region
        $region13: #{tpu_custom_call.1} parent=11 // pred_check
          %p174 = pneg %p65
        $region14: #{tpu_custom_call.1} parent=11 // pred_check_branch
          %176 = sbr.rel (%p174) target = $region16
        $region15: #{tpu_custom_call.1} parent=11 // pred_region
          _
        $region16: #{tpu_custom_call.1} parent=11 // pred_fallthru
          _
        // Predicated region
        $region17: #{tpu_custom_call.1} parent=11 // pred_check
          %p177 = pneg %p86
        $region18: #{tpu_custom_call.1} parent=11 // pred_check_branch
          %179 = sbr.rel (%p177) target = $region20
        $region19: #{tpu_custom_call.1} parent=11 // pred_region
          _
        $region20: #{tpu_custom_call.1} parent=11 // pred_fallthru
          _
        // Predicated region
        $region21: #{tpu_custom_call.1} parent=11 // pred_check
          %p180 = pneg %p107
        $region22: #{tpu_custom_call.1} parent=11 // pred_check_branch
          %182 = sbr.rel (%p180) target = $region24
        $region23: #{tpu_custom_call.1} parent=11 // pred_region
          _
        $region24: #{tpu_custom_call.1} parent=11 // pred_fallthru
          _
      $region12: #{tpu_custom_call.1} parent=5 // pred_fallthru
        _
      %p183 = scmp.lt.s32.totalorder %s18, 2
      // Predicated region
      $region25: #{tpu_custom_call.1} parent=5 // pred_check
        %p184 = pneg %p183
      $region26: #{tpu_custom_call.1} parent=5 // pred_check_branch
        %186 = sbr.rel (%p184) target = $region28
      $region27: #{tpu_custom_call.1} parent=5 // pred_region
        // Predicated region
        $region29: #{tpu_custom_call.1} parent=27 // pred_check
          %p187 = pneg %p38
        $region30: #{tpu_custom_call.1} parent=27 // pred_check_branch
          %189 = sbr.rel (%p187) target = $region32
        $region31: #{tpu_custom_call.1} parent=27 // pred_region
          %s190 = sand.u32 %s28, 1
          %s191 = scalar_lea.sflag [#allocation4], %s190
          %s192 = sand.u32 %s28, 1
          %s193 = smul.addr %s192, 64
          %s194 = scalar_lea.vmem [#allocation3], %s193
          %s196 = ssub.s32 1024, 1024
          %197 = vsyncadd %s191, %s196
          %s198 = smul.addr %s18, 8
          %s199 = smul.addr %s198, 128
          %s200 = scalar_lea.hbm %s0, %s199
          %s201 = sshll.u32 %s194, 4
          %s202 = int_to_ptr.vmem [resolvable:$true] %s201
          %207 = dma.hbm_to_vmem [thread:$0]  %s200, 1024, %s202, %s191, 128, 128, 8
        $region32: #{tpu_custom_call.1} parent=27 // pred_fallthru
          _
      $region28: #{tpu_custom_call.1} parent=5 // pred_fallthru
        _
      %p208 = scmp.le.s32.totalorder 1, %s18
      %p209 = scmp.lt.s32.totalorder %s18, 3
      %p210 = pnand %p208, %p209
      %p211 = pneg %p210
      // Predicated region
      $region33: #{tpu_custom_call.1} parent=5 // pred_check
        _
      $region34: #{tpu_custom_call.1} parent=5 // pred_check_branch
        %213 = sbr.rel (%p210) target = $region36
      $region35: #{tpu_custom_call.1} parent=5 // pred_region
        %s214 = ssub.s32 %s18, 1
        %s215 = sand.u32 %s31, 1
        %s216 = scalar_lea.sflag [#allocation4], %s215
        %s217 = sand.u32 %s31, 1
        %s218 = smul.addr %s217, 64
        %s219 = scalar_lea.vmem [#allocation3], %s218
        // Predicated region
        $region37: #{tpu_custom_call.1} parent=35 // pred_check
          %p220 = pneg %p44
        $region38: #{tpu_custom_call.1} parent=35 // pred_check_branch
          %222 = sbr.rel (%p220) target = $region40
        $region39: #{tpu_custom_call.1} parent=35 // pred_region
          %223 = dma.done %s216, 1024
        $region40: #{tpu_custom_call.1} parent=35 // pred_fallthru
          _
        %s224 = sand.u32 %s31, 1
        %s225 = scalar_lea.sflag [#allocation4], %s224
        %s226 = sand.u32 %s31, 1
        %s227 = smul.addr %s226, 64
        %s228 = scalar_lea.vmem [#allocation3], %s227
        %p229 = pneg %p44
        %p230 = pneg %p41
        %p231 = pneg %p65
        %p232 = pneg %p62
        %p233 = pneg %p86
        %p234 = pneg %p83
        %p235 = pneg %p107
        %p236 = pneg %p104
        %p237 = pneg %p133
        %p238 = pneg %p130
        %p239 = scmp.lt.s32.totalorder %s23, 1
        %s240 = scalar_select %p239, %s23, 1
        %s241 = smul.addr %s240, 8
        %s242 = smul.addr %s241, 8
        %s243 = scalar_lea.vmem %s4, %s242
        %p244 = pneg %p159
        %p245 = pneg %p156
        %s246 = sand.u32 %s146, 1
        %s247 = scalar_lea.sflag [#allocation5], %s246
        %s248 = sand.u32 %s146, 1
        %s249 = smul.addr %s248, 2
        %s250 = scalar_lea.vmem [#allocation6], %s249
        %p251 = scmp.lt.s32.totalorder %s23, 1
        %s252 = scalar_select %p251, %s23, 1
        %s253 = smul.addr %s252, 8
        %s254 = smul.addr %s253, 8
        %s255 = scalar_lea.vmem %s4, %s254
        %v256 = vld [vmem:[%s219] sm:$0xff]
        %v257 = vld [vmem:[%s219 + $0x8] sm:$0xff]
        %v258 = vld [vmem:[%s219 + $0x10] sm:$0xff]
        %v259 = vld [vmem:[%s219 + $0x18] sm:$0xff]
        %v260 = vld [vmem:[%s219 + $0x20] sm:$0xff]
        %v261 = vld [vmem:[%s219 + $0x28] sm:$0xff]
        %v262 = vld [vmem:[%s219 + $0x30] sm:$0xff]
        %v263 = vld [vmem:[%s219 + $0x38] sm:$0xff]
        %v264 = vld [vmem:[%s1] sm:$0x1]
        %v266 = vlaneseq
        %v267 = vshrl.u32 %v266, 7
        %v268 = vsub.s32 0, %v267
        %v269 = vrot.slane %v264, %v268
        %v271 = vmul.f32 %v256, %v269
        %v272 = vmul.f32 %v257, %v269
        %v273 = vmul.f32 %v258, %v269
        %v274 = vmul.f32 %v259, %v269
        %v275 = vmul.f32 %v260, %v269
        %v276 = vmul.f32 %v261, %v269
        %v277 = vmul.f32 %v262, %v269
        %v278 = vmul.f32 %v263, %v269
        %v279 = vld [vmem:[%s2] sm:$0x1]
        %v281 = vlaneseq
        %v282 = vshrl.u32 %v281, 7
        %v283 = vsub.s32 0, %v282
        %v284 = vrot.slane %v279, %v283
        %v286 = vadd.f32 %v271, %v284
        %v287 = vadd.f32 %v272, %v284
        %v288 = vadd.f32 %v273, %v284
        %v289 = vadd.f32 %v274, %v284
        %v290 = vadd.f32 %v275, %v284
        %v291 = vadd.f32 %v276, %v284
        %v292 = vadd.f32 %v277, %v284
        %v293 = vadd.f32 %v278, %v284
        %v294 = vmax.f32 %v286, 0.0
        %v295 = vmax.f32 %v287, 0.0
        %v296 = vmax.f32 %v288, 0.0
        %v297 = vmax.f32 %v289, 0.0
        %v298 = vmax.f32 %v290, 0.0
        %v299 = vmax.f32 %v291, 0.0
        %v300 = vmax.f32 %v292, 0.0
        %v301 = vmax.f32 %v293, 0.0
        %vm302 = vcmask 195584
        %303 = vst.msk [vmem:[#allocation2] sm:$0xff] %vm302, 0.0
        %s304 = scalar_lea.vmem [#allocation2], 72
        %305 = vst.msk [vmem:[%s304] sm:$0xff] %vm302, 0.0
        %s306 = scalar_lea.vmem [#allocation2], 8
        %vm307 = vcmask 57344
        %308 = vst.msk [vmem:[%s306] sm:$0x1] %vm307, 0.0
        %309 = vst.msk [vmem:[%s306 + $0x8] sm:$0x1] %vm307, 0.0
        %310 = vst.msk [vmem:[%s306 + $0x10] sm:$0x1] %vm307, 0.0
        %311 = vst.msk [vmem:[%s306 + $0x18] sm:$0x1] %vm307, 0.0
        %312 = vst.msk [vmem:[%s306 + $0x20] sm:$0x1] %vm307, 0.0
        %313 = vst.msk [vmem:[%s306 + $0x28] sm:$0x1] %vm307, 0.0
        %314 = vst.msk [vmem:[%s306 + $0x30] sm:$0x1] %vm307, 0.0
        %315 = vst.msk [vmem:[%s306 + $0x38] sm:$0x1] %vm307, 0.0
        %vm316 = vcmask 63488
        %317 = vst.msk [vmem:[%s306 + $0x1] sm:$0x7f] %vm316, %v294
        %318 = vst.msk [vmem:[%s306 + $0x9] sm:$0x7f] %vm316, %v295
        %319 = vst.msk [vmem:[%s306 + $0x11] sm:$0x7f] %vm316, %v296
        %320 = vst.msk [vmem:[%s306 + $0x19] sm:$0x7f] %vm316, %v297
        %321 = vst.msk [vmem:[%s306 + $0x21] sm:$0x7f] %vm316, %v298
        %322 = vst.msk [vmem:[%s306 + $0x29] sm:$0x7f] %vm316, %v299
        %323 = vst.msk [vmem:[%s306 + $0x31] sm:$0x7f] %vm316, %v300
        %324 = vst.msk [vmem:[%s306 + $0x39] sm:$0x7f] %vm316, %v301
        %333 = vrot.lane.b32.xlu0 %v294, 8
        %v334 = vpop.permute.xlu0 %333
        %335 = vrot.lane.b32.xlu0 %v295, 8
        %v336 = vpop.permute.xlu0 %335
        %337 = vrot.lane.b32.xlu0 %v296, 8
        %v338 = vpop.permute.xlu0 %337
        %339 = vrot.lane.b32.xlu0 %v297, 8
        %v340 = vpop.permute.xlu0 %339
        %341 = vrot.lane.b32.xlu0 %v298, 8
        %v342 = vpop.permute.xlu0 %341
        %343 = vrot.lane.b32.xlu0 %v299, 8
        %v344 = vpop.permute.xlu0 %343
        %345 = vrot.lane.b32.xlu0 %v300, 8
        %v346 = vpop.permute.xlu0 %345
        %347 = vrot.lane.b32.xlu0 %v301, 8
        %v348 = vpop.permute.xlu0 %347
        %vm357 = vcmask 130112
        %358 = vst.msk [vmem:[%s306] sm:$0xff] %vm357, %v334
        %359 = vst.msk [vmem:[%s306 + $0x8] sm:$0xff] %vm357, %v336
        %360 = vst.msk [vmem:[%s306 + $0x10] sm:$0xff] %vm357, %v338
        %361 = vst.msk [vmem:[%s306 + $0x18] sm:$0xff] %vm357, %v340
        %362 = vst.msk [vmem:[%s306 + $0x20] sm:$0xff] %vm357, %v342
        %363 = vst.msk [vmem:[%s306 + $0x28] sm:$0xff] %vm357, %v344
        %364 = vst.msk [vmem:[%s306 + $0x30] sm:$0xff] %vm357, %v346
        %365 = vst.msk [vmem:[%s306 + $0x38] sm:$0xff] %vm357, %v348
        %366 = vrot.lane.b32.xlu0 %v294, 16
        %v367 = vpop.permute.xlu0 %366
        %368 = vrot.lane.b32.xlu0 %v295, 16
        %v369 = vpop.permute.xlu0 %368
        %370 = vrot.lane.b32.xlu0 %v296, 16
        %v371 = vpop.permute.xlu0 %370
        %372 = vrot.lane.b32.xlu0 %v297, 16
        %v373 = vpop.permute.xlu0 %372
        %374 = vrot.lane.b32.xlu0 %v298, 16
        %v375 = vpop.permute.xlu0 %374
        %376 = vrot.lane.b32.xlu0 %v299, 16
        %v377 = vpop.permute.xlu0 %376
        %378 = vrot.lane.b32.xlu0 %v300, 16
        %v379 = vpop.permute.xlu0 %378
        %380 = vrot.lane.b32.xlu0 %v301, 16
        %v381 = vpop.permute.xlu0 %380
        %vm390 = vcmask 195713
        %391 = vst.msk [vmem:[%s306 - $0x1] sm:$0xfe] %vm390, %v367
        %392 = vst.msk [vmem:[%s306 + $0x7] sm:$0xfe] %vm390, %v369
        %393 = vst.msk [vmem:[%s306 + $0xf] sm:$0xfe] %vm390, %v371
        %394 = vst.msk [vmem:[%s306 + $0x17] sm:$0xfe] %vm390, %v373
        %395 = vst.msk [vmem:[%s306 + $0x1f] sm:$0xfe] %vm390, %v375
        %396 = vst.msk [vmem:[%s306 + $0x27] sm:$0xfe] %vm390, %v377
        %397 = vst.msk [vmem:[%s306 + $0x2f] sm:$0xfe] %vm390, %v379
        %398 = vst.msk [vmem:[%s306 + $0x37] sm:$0xfe] %vm390, %v381
        %vm399 = vcmask 188544
        %400 = vst.msk [vmem:[%s306 + $0x7] sm:$0x1] %vm399, 0.0
        %401 = vst.msk [vmem:[%s306 + $0xf] sm:$0x1] %vm399, 0.0
        %402 = vst.msk [vmem:[%s306 + $0x17] sm:$0x1] %vm399, 0.0
        %403 = vst.msk [vmem:[%s306 + $0x1f] sm:$0x1] %vm399, 0.0
        %404 = vst.msk [vmem:[%s306 + $0x27] sm:$0x1] %vm399, 0.0
        %405 = vst.msk [vmem:[%s306 + $0x2f] sm:$0x1] %vm399, 0.0
        %406 = vst.msk [vmem:[%s306 + $0x37] sm:$0x1] %vm399, 0.0
        %407 = vst.msk [vmem:[%s306 + $0x3f] sm:$0x1] %vm399, 0.0
        %v408 = vld [vmem:[#allocation2] sm:$0xff]
        %v409 = vld [vmem:[#allocation2 + $0x8] sm:$0xff]
        %v410 = vld [vmem:[#allocation2 + $0x10] sm:$0xff]
        %v411 = vld [vmem:[#allocation2 + $0x18] sm:$0xff]
        %v412 = vld [vmem:[#allocation2 + $0x20] sm:$0xff]
        %v413 = vld [vmem:[#allocation2 + $0x28] sm:$0xff]
        %v414 = vld [vmem:[#allocation2 + $0x30] sm:$0xff]
        %v415 = vld [vmem:[#allocation2 + $0x38] sm:$0xff]
        %v416 = vld [vmem:[%s3] sm:$0xff]
        %v417 = vld [vmem:[%s3 + $0x8] sm:$0xff]
        %v418 = vld [vmem:[%s3 + $0x10] sm:$0xff]
        %v419 = vld [vmem:[%s306] sm:$0xff]
        %v420 = vld [vmem:[%s306 + $0x8] sm:$0xff]
        %v421 = vld [vmem:[%s306 + $0x10] sm:$0xff]
        %v422 = vld [vmem:[%s306 + $0x18] sm:$0xff]
        %v423 = vld [vmem:[%s306 + $0x20] sm:$0xff]
        %v424 = vld [vmem:[%s306 + $0x28] sm:$0xff]
        %v425 = vld [vmem:[%s306 + $0x30] sm:$0xff]
        %v426 = vld [vmem:[%s306 + $0x38] sm:$0xff]
        %s427 = scalar_lea.vmem %s3, 24
        %v428 = vld [vmem:[%s427] sm:$0xff]
        %v429 = vld [vmem:[%s427 + $0x8] sm:$0xff]
        %v430 = vld [vmem:[%s427 + $0x10] sm:$0xff]
        %v432 = vsel %vm302, %v419, 0
        %v435 = vsel %vm302, %v420, 0
        %v438 = vsel %vm302, %v421, 0
        %v441 = vsel %vm302, %v422, 0
        %v444 = vsel %vm302, %v423, 0
        %v447 = vsel %vm302, %v424, 0
        %v450 = vsel %vm302, %v425, 0
        %v453 = vsel %vm302, %v426, 0
        %455 = vmatprep.subr.mxu0 0.0
        %456 = vmatpush1.msra.mxu0 %v428
        %457 = vmatprep.subr.mxu0 0.0
        %458 = vmatpush1.msra.mxu0 %v429
        %459 = vmatprep.subr.mxu0 0.0
        %460 = vmatpush1.msra.mxu0 %v430
        %461 = vmatprep.subr.mxu0 0.0
        %462 = vmatpush1.msra.mxu0 0.0
        %463 = vmatprep.subr.mxu0 0.0
        %464 = vmatpush1.msra.mxu0 0.0
        %465 = vmatprep.subr.mxu0 0.0
        %466 = vmatpush1.msra.mxu0 0.0
        %467 = vmatprep.subr.mxu0 0.0
        %468 = vmatpush1.msra.mxu0 0.0
        %469 = vmatprep.subr.mxu0 0.0
        %470 = vmatpush1.msra.mxu0 0.0
        %471 = vmatprep.subr.mxu0 0.0
        %472 = vmatpush1.msra.mxu0 0.0
        %473 = vmatprep.subr.mxu0 0.0
        %474 = vmatpush1.msra.mxu0 0.0
        %475 = vmatprep.subr.mxu0 0.0
        %476 = vmatpush1.msra.mxu0 0.0
        %477 = vmatprep.subr.mxu0 0.0
        %478 = vmatpush1.msra.mxu0 0.0
        %479 = vmatprep.subr.mxu0 0.0
        %480 = vmatpush1.msra.mxu0 0.0
        %481 = vmatprep.subr.mxu0 0.0
        %482 = vmatpush1.msra.mxu0 0.0
        %483 = vmatprep.subr.mxu0 0.0
        %484 = vmatpush1.msra.mxu0 0.0
        %485 = vmatprep.subr.mxu0 0.0
        %486 = vmatpush1.msra.mxu0 0.0
        %487 = vmatprep.subr.mxu0 0.0
        %488 = vmatpush1.msra.mxu0 0.0
        %489 = vmatprep.subr.mxu0 0.0
        %490 = vmatpush1.msra.mxu0 0.0
        %491 = vmatprep.subr.mxu0 0.0
        %492 = vmatpush1.msra.mxu0 0.0
        %493 = vmatprep.subr.mxu0 0.0
        %494 = vmatpush1.msra.mxu0 0.0
        %495 = vmatprep.subr.mxu0 0.0
        %496 = vmatpush1.msra.mxu0 0.0
        %497 = vmatprep.subr.mxu0 0.0
        %498 = vmatpush1.msra.mxu0 0.0
        %499 = vmatprep.subr.mxu0 0.0
        %500 = vmatpush1.msra.mxu0 0.0
        %501 = vmatprep.subr.mxu0 0.0
        %502 = vmatpush1.msra.mxu0 0.0
        %503 = vmatprep.subr.mxu0 0.0
        %504 = vmatpush1.msra.mxu0 0.0
        %505 = vmatprep.subr.mxu0 0.0
        %506 = vmatpush1.msra.mxu0 0.0
        %507 = vmatprep.subr.mxu0 0.0
        %508 = vmatpush1.msra.mxu0 0.0
        %509 = vmatprep.subr.mxu0 0.0
        %510 = vmatpush1.msra.mxu0 0.0
        %511 = vmatprep.subr.mxu0 0.0
        %512 = vmatpush1.msra.mxu0 0.0
        %513 = vmatprep.subr.mxu0 0.0
        %514 = vmatpush1.msra.mxu0 0.0
        %515 = vmatprep.subr.mxu0 0.0
        %516 = vmatpush1.msra.mxu0 0.0
        %517 = vmatprep.subr.mxu0 0.0
        %518 = vmatpush1.msra.mxu0 0.0
        %519 = vmatprep.mubr.f32.mxu0 0.0
        %520 = vmatmul.mubr.f32.gmra.mrb[0].mxu0 %v432
        %v521 = vpop.f32.mrb[0].mxu0
        %v522 = vadd.f32 0.0, %v521
        %v523 = vpop.f32.mrb[0].mxu0
        %524 = vmatprep.mubr.f32.mxu0 0.0
        %525 = vmatmul.mubr.f32.gmra.mrb[0].mxu0 %v435
        %v526 = vpop.f32.mrb[0].mxu0
        %v527 = vadd.f32 0.0, %v526
        %v528 = vpop.f32.mrb[0].mxu0
        %529 = vmatprep.mubr.f32.mxu0 0.0
        %530 = vmatmul.mubr.f32.gmra.mrb[0].mxu0 %v438
        %v531 = vpop.f32.mrb[0].mxu0
        %v532 = vadd.f32 0.0, %v531
        %v533 = vpop.f32.mrb[0].mxu0
        %534 = vmatprep.mubr.f32.mxu0 0.0
        %535 = vmatmul.mubr.f32.gmra.mrb[0].mxu0 %v441
        %v536 = vpop.f32.mrb[0].mxu0
        %v537 = vadd.f32 0.0, %v536
        %v538 = vpop.f32.mrb[0].mxu0
        %539 = vmatprep.mubr.f32.mxu0 0.0
        %540 = vmatmul.mubr.f32.gmra.mrb[0].mxu0 %v444
        %v541 = vpop.f32.mrb[0].mxu0
        %v542 = vadd.f32 0.0, %v541
        %v543 = vpop.f32.mrb[0].mxu0
        %544 = vmatprep.mubr.f32.mxu0 0.0
        %545 = vmatmul.mubr.f32.gmra.mrb[0].mxu0 %v447
        %v546 = vpop.f32.mrb[0].mxu0
        %v547 = vadd.f32 0.0, %v546
        %v548 = vpop.f32.mrb[0].mxu0
        %549 = vmatprep.mubr.f32.mxu0 0.0
        %550 = vmatmul.mubr.f32.gmra.mrb[0].mxu0 %v450
        %v551 = vpop.f32.mrb[0].mxu0
        %v552 = vadd.f32 0.0, %v551
        %v553 = vpop.f32.mrb[0].mxu0
        %554 = vmatprep.mubr.f32.mxu0 0.0
        %555 = vmatmul.mubr.f32.gmra.mrb[0].mxu0 %v453
        %v556 = vpop.f32.mrb[0].mxu0
        %v557 = vadd.f32 0.0, %v556
        %v558 = vpop.f32.mrb[0].mxu0
        %559 = vdwg.mxu0
        %v561 = vsel %vm302, %v408, 0
        %v564 = vsel %vm302, %v409, 0
        %v567 = vsel %vm302, %v410, 0
        %v570 = vsel %vm302, %v411, 0
        %v573 = vsel %vm302, %v412, 0
        %v576 = vsel %vm302, %v413, 0
        %v579 = vsel %vm302, %v414, 0
        %v582 = vsel %vm302, %v415, 0
        %584 = vmatprep.subr.mxu0 0.0
        %585 = vmatpush1.msra.mxu0 %v416
        %586 = vmatprep.subr.mxu0 0.0
        %587 = vmatpush1.msra.mxu0 %v417
        %588 = vmatprep.subr.mxu0 0.0
        %589 = vmatpush1.msra.mxu0 %v418
        %590 = vmatprep.subr.mxu0 0.0
        %591 = vmatpush1.msra.mxu0 0.0
        %592 = vmatprep.subr.mxu0 0.0
        %593 = vmatpush1.msra.mxu0 0.0
        %594 = vmatprep.subr.mxu0 0.0
        %595 = vmatpush1.msra.mxu0 0.0
        %596 = vmatprep.subr.mxu0 0.0
        %597 = vmatpush1.msra.mxu0 0.0
        %598 = vmatprep.subr.mxu0 0.0
        %599 = vmatpush1.msra.mxu0 0.0
        %600 = vmatprep.subr.mxu0 0.0
        %601 = vmatpush1.msra.mxu0 0.0
        %602 = vmatprep.subr.mxu0 0.0
        %603 = vmatpush1.msra.mxu0 0.0
        %604 = vmatprep.subr.mxu0 0.0
        %605 = vmatpush1.msra.mxu0 0.0
        %606 = vmatprep.subr.mxu0 0.0
        %607 = vmatpush1.msra.mxu0 0.0
        %608 = vmatprep.subr.mxu0 0.0
        %609 = vmatpush1.msra.mxu0 0.0
        %610 = vmatprep.subr.mxu0 0.0
        %611 = vmatpush1.msra.mxu0 0.0
        %612 = vmatprep.subr.mxu0 0.0
        %613 = vmatpush1.msra.mxu0 0.0
        %614 = vmatprep.subr.mxu0 0.0
        %615 = vmatpush1.msra.mxu0 0.0
        %616 = vmatprep.subr.mxu0 0.0
        %617 = vmatpush1.msra.mxu0 0.0
        %618 = vmatprep.subr.mxu0 0.0
        %619 = vmatpush1.msra.mxu0 0.0
        %620 = vmatprep.subr.mxu0 0.0
        %621 = vmatpush1.msra.mxu0 0.0
        %622 = vmatprep.subr.mxu0 0.0
        %623 = vmatpush1.msra.mxu0 0.0
        %624 = vmatprep.subr.mxu0 0.0
        %625 = vmatpush1.msra.mxu0 0.0
        %626 = vmatprep.subr.mxu0 0.0
        %627 = vmatpush1.msra.mxu0 0.0
        %628 = vmatprep.subr.mxu0 0.0
        %629 = vmatpush1.msra.mxu0 0.0
        %630 = vmatprep.subr.mxu0 0.0
        %631 = vmatpush1.msra.mxu0 0.0
        %632 = vmatprep.subr.mxu0 0.0
        %633 = vmatpush1.msra.mxu0 0.0
        %634 = vmatprep.subr.mxu0 0.0
        %635 = vmatpush1.msra.mxu0 0.0
        %636 = vmatprep.subr.mxu0 0.0
        %637 = vmatpush1.msra.mxu0 0.0
        %638 = vmatprep.subr.mxu0 0.0
        %639 = vmatpush1.msra.mxu0 0.0
        %640 = vmatprep.subr.mxu0 0.0
        %641 = vmatpush1.msra.mxu0 0.0
        %642 = vmatprep.subr.mxu0 0.0
        %643 = vmatpush1.msra.mxu0 0.0
        %644 = vmatprep.subr.mxu0 0.0
        %645 = vmatpush1.msra.mxu0 0.0
        %646 = vmatprep.subr.mxu0 0.0
        %647 = vmatpush1.msra.mxu0 0.0
        %648 = vmatprep.mubr.f32.mxu0 0.0
        %649 = vmatmul.mubr.f32.gmra.mrb[0].mxu0 %v561
        %v650 = vpop.f32.mrb[0].mxu0
        %v651 = vadd.f32 %v522, %v650
        %v652 = vpop.f32.mrb[0].mxu0
        %653 = vmatprep.mubr.f32.mxu0 0.0
        %654 = vmatmul.mubr.f32.gmra.mrb[0].mxu0 %v564
        %v655 = vpop.f32.mrb[0].mxu0
        %v656 = vadd.f32 %v527, %v655
        %v657 = vpop.f32.mrb[0].mxu0
        %658 = vmatprep.mubr.f32.mxu0 0.0
        %659 = vmatmul.mubr.f32.gmra.mrb[0].mxu0 %v567
        %v660 = vpop.f32.mrb[0].mxu0
        %v661 = vadd.f32 %v532, %v660
        %v662 = vpop.f32.mrb[0].mxu0
        %663 = vmatprep.mubr.f32.mxu0 0.0
        %664 = vmatmul.mubr.f32.gmra.mrb[0].mxu0 %v570
        %v665 = vpop.f32.mrb[0].mxu0
        %v666 = vadd.f32 %v537, %v665
        %v667 = vpop.f32.mrb[0].mxu0
        %668 = vmatprep.mubr.f32.mxu0 0.0
        %669 = vmatmul.mubr.f32.gmra.mrb[0].mxu0 %v573
        %v670 = vpop.f32.mrb[0].mxu0
        %v671 = vadd.f32 %v542, %v670
        %v672 = vpop.f32.mrb[0].mxu0
        %673 = vmatprep.mubr.f32.mxu0 0.0
        %674 = vmatmul.mubr.f32.gmra.mrb[0].mxu0 %v576
        %v675 = vpop.f32.mrb[0].mxu0
        %v676 = vadd.f32 %v547, %v675
        %v677 = vpop.f32.mrb[0].mxu0
        %678 = vmatprep.mubr.f32.mxu0 0.0
        %679 = vmatmul.mubr.f32.gmra.mrb[0].mxu0 %v579
        %v680 = vpop.f32.mrb[0].mxu0
        %v681 = vadd.f32 %v552, %v680
        %v682 = vpop.f32.mrb[0].mxu0
        %683 = vmatprep.mubr.f32.mxu0 0.0
        %684 = vmatmul.mubr.f32.gmra.mrb[0].mxu0 %v582
        %v685 = vpop.f32.mrb[0].mxu0
        %v686 = vadd.f32 %v557, %v685
        %v687 = vpop.f32.mrb[0].mxu0
        %688 = vdwg.mxu0
        %s689 = scalar_lea.vmem [#allocation2], 16
        %v690 = vld [vmem:[%s689] sm:$0xff]
        %v691 = vld [vmem:[%s689 + $0x8] sm:$0xff]
        %v692 = vld [vmem:[%s689 + $0x10] sm:$0xff]
        %v693 = vld [vmem:[%s689 + $0x18] sm:$0xff]
        %v694 = vld [vmem:[%s689 + $0x20] sm:$0xff]
        %v695 = vld [vmem:[%s689 + $0x28] sm:$0xff]
        %v696 = vld [vmem:[%s689 + $0x30] sm:$0xff]
        %v697 = vld [vmem:[%s689 + $0x38] sm:$0xff]
        %s698 = scalar_lea.vmem %s3, 48
        %v699 = vld [vmem:[%s698] sm:$0xff]
        %v700 = vld [vmem:[%s698 + $0x8] sm:$0xff]
        %v701 = vld [vmem:[%s698 + $0x10] sm:$0xff]
        %v703 = vsel %vm302, %v690, 0
        %v706 = vsel %vm302, %v691, 0
        %v709 = vsel %vm302, %v692, 0
        %v712 = vsel %vm302, %v693, 0
        %v715 = vsel %vm302, %v694, 0
        %v718 = vsel %vm302, %v695, 0
        %v721 = vsel %vm302, %v696, 0
        %v724 = vsel %vm302, %v697, 0
        %726 = vmatprep.subr.mxu0 0.0
        %727 = vmatpush1.msra.mxu0 %v699
        %728 = vmatprep.subr.mxu0 0.0
        %729 = vmatpush1.msra.mxu0 %v700
        %730 = vmatprep.subr.mxu0 0.0
        %731 = vmatpush1.msra.mxu0 %v701
        %732 = vmatprep.subr.mxu0 0.0
        %733 = vmatpush1.msra.mxu0 0.0
        %734 = vmatprep.subr.mxu0 0.0
        %735 = vmatpush1.msra.mxu0 0.0
        %736 = vmatprep.subr.mxu0 0.0
        %737 = vmatpush1.msra.mxu0 0.0
        %738 = vmatprep.subr.mxu0 0.0
        %739 = vmatpush1.msra.mxu0 0.0
        %740 = vmatprep.subr.mxu0 0.0
        %741 = vmatpush1.msra.mxu0 0.0
        %742 = vmatprep.subr.mxu0 0.0
        %743 = vmatpush1.msra.mxu0 0.0
        %744 = vmatprep.subr.mxu0 0.0
        %745 = vmatpush1.msra.mxu0 0.0
        %746 = vmatprep.subr.mxu0 0.0
        %747 = vmatpush1.msra.mxu0 0.0
        %748 = vmatprep.subr.mxu0 0.0
        %749 = vmatpush1.msra.mxu0 0.0
        %750 = vmatprep.subr.mxu0 0.0
        %751 = vmatpush1.msra.mxu0 0.0
        %752 = vmatprep.subr.mxu0 0.0
        %753 = vmatpush1.msra.mxu0 0.0
        %754 = vmatprep.subr.mxu0 0.0
        %755 = vmatpush1.msra.mxu0 0.0
        %756 = vmatprep.subr.mxu0 0.0
        %757 = vmatpush1.msra.mxu0 0.0
        %758 = vmatprep.subr.mxu0 0.0
        %759 = vmatpush1.msra.mxu0 0.0
        %760 = vmatprep.subr.mxu0 0.0
        %761 = vmatpush1.msra.mxu0 0.0
        %762 = vmatprep.subr.mxu0 0.0
        %763 = vmatpush1.msra.mxu0 0.0
        %764 = vmatprep.subr.mxu0 0.0
        %765 = vmatpush1.msra.mxu0 0.0
        %766 = vmatprep.subr.mxu0 0.0
        %767 = vmatpush1.msra.mxu0 0.0
        %768 = vmatprep.subr.mxu0 0.0
        %769 = vmatpush1.msra.mxu0 0.0
        %770 = vmatprep.subr.mxu0 0.0
        %771 = vmatpush1.msra.mxu0 0.0
        %772 = vmatprep.subr.mxu0 0.0
        %773 = vmatpush1.msra.mxu0 0.0
        %774 = vmatprep.subr.mxu0 0.0
        %775 = vmatpush1.msra.mxu0 0.0
        %776 = vmatprep.subr.mxu0 0.0
        %777 = vmatpush1.msra.mxu0 0.0
        %778 = vmatprep.subr.mxu0 0.0
        %779 = vmatpush1.msra.mxu0 0.0
        %780 = vmatprep.subr.mxu0 0.0
        %781 = vmatpush1.msra.mxu0 0.0
        %782 = vmatprep.subr.mxu0 0.0
        %783 = vmatpush1.msra.mxu0 0.0
        %784 = vmatprep.subr.mxu0 0.0
        %785 = vmatpush1.msra.mxu0 0.0
        %786 = vmatprep.subr.mxu0 0.0
        %787 = vmatpush1.msra.mxu0 0.0
        %788 = vmatprep.subr.mxu0 0.0
        %789 = vmatpush1.msra.mxu0 0.0
        %790 = vmatprep.mubr.f32.mxu0 0.0
        %791 = vmatmul.mubr.f32.gmra.mrb[0].mxu0 %v703
        %v792 = vpop.f32.mrb[0].mxu0
        %v793 = vadd.f32 0.0, %v792
        %v794 = vpop.f32.mrb[0].mxu0
        %795 = vmatprep.mubr.f32.mxu0 0.0
        %796 = vmatmul.mubr.f32.gmra.mrb[0].mxu0 %v706
        %v797 = vpop.f32.mrb[0].mxu0
        %v798 = vadd.f32 0.0, %v797
        %v799 = vpop.f32.mrb[0].mxu0
        %800 = vmatprep.mubr.f32.mxu0 0.0
        %801 = vmatmul.mubr.f32.gmra.mrb[0].mxu0 %v709
        %v802 = vpop.f32.mrb[0].mxu0
        %v803 = vadd.f32 0.0, %v802
        %v804 = vpop.f32.mrb[0].mxu0
        %805 = vmatprep.mubr.f32.mxu0 0.0
        %806 = vmatmul.mubr.f32.gmra.mrb[0].mxu0 %v712
        %v807 = vpop.f32.mrb[0].mxu0
        %v808 = vadd.f32 0.0, %v807
        %v809 = vpop.f32.mrb[0].mxu0
        %810 = vmatprep.mubr.f32.mxu0 0.0
        %811 = vmatmul.mubr.f32.gmra.mrb[0].mxu0 %v715
        %v812 = vpop.f32.mrb[0].mxu0
        %v813 = vadd.f32 0.0, %v812
        %v814 = vpop.f32.mrb[0].mxu0
        %815 = vmatprep.mubr.f32.mxu0 0.0
        %816 = vmatmul.mubr.f32.gmra.mrb[0].mxu0 %v718
        %v817 = vpop.f32.mrb[0].mxu0
        %v818 = vadd.f32 0.0, %v817
        %v819 = vpop.f32.mrb[0].mxu0
        %820 = vmatprep.mubr.f32.mxu0 0.0
        %821 = vmatmul.mubr.f32.gmra.mrb[0].mxu0 %v721
        %v822 = vpop.f32.mrb[0].mxu0
        %v823 = vadd.f32 0.0, %v822
        %v824 = vpop.f32.mrb[0].mxu0
        %825 = vmatprep.mubr.f32.mxu0 0.0
        %826 = vmatmul.mubr.f32.gmra.mrb[0].mxu0 %v724
        %v827 = vpop.f32.mrb[0].mxu0
        %v828 = vadd.f32 0.0, %v827
        %v829 = vpop.f32.mrb[0].mxu0
        %830 = vdwg.mxu0
        %v831 = vadd.f32 %v651, %v793
        %v832 = vadd.f32 %v656, %v798
        %v833 = vadd.f32 %v661, %v803
        %v834 = vadd.f32 %v666, %v808
        %v835 = vadd.f32 %v671, %v813
        %v836 = vadd.f32 %v676, %v818
        %v837 = vadd.f32 %v681, %v823
        %v838 = vadd.f32 %v686, %v828
        %vm839 = vcmask 64512
        %v840 = vsel %vm839, %v831, 0.0
        %v841 = vsel %vm839, %v832, 0.0
        %v842 = vadd.f32 %v840, %v841
        %v843 = vsel %vm839, %v833, 0.0
        %v844 = vadd.f32 %v842, %v843
        %v845 = vsel %vm839, %v834, 0.0
        %v846 = vadd.f32 %v844, %v845
        %v847 = vsel %vm839, %v835, 0.0
        %v848 = vadd.f32 %v846, %v847
        %v849 = vsel %vm839, %v836, 0.0
        %v850 = vadd.f32 %v848, %v849
        %v851 = vsel %vm839, %v837, 0.0
        %v852 = vadd.f32 %v850, %v851
        %v853 = vsel %vm839, %v838, 0.0
        %v854 = vadd.f32 %v852, %v853
        %v855 = vrot.slane %v854, 4
        %v856 = vadd.f32 %v854, %v855
        %v857 = vrot.slane %v856, 2
        %v858 = vadd.f32 %v856, %v857
        %v859 = vrot.slane %v858, 1
        %v860 = vadd.f32 %v858, %v859
        %861 = vst.msk [vmem:[%s250] sm:$0x1] %vm307, %v860
        %v862 = vmul.f32 %v831, %v831
        %v863 = vmul.f32 %v832, %v832
        %v864 = vmul.f32 %v833, %v833
        %v865 = vmul.f32 %v834, %v834
        %v866 = vmul.f32 %v835, %v835
        %v867 = vmul.f32 %v836, %v836
        %v868 = vmul.f32 %v837, %v837
        %v869 = vmul.f32 %v838, %v838
        %v870 = vsel %vm839, %v862, 0.0
        %v871 = vsel %vm839, %v863, 0.0
        %v872 = vadd.f32 %v870, %v871
        %v873 = vsel %vm839, %v864, 0.0
        %v874 = vadd.f32 %v872, %v873
        %v875 = vsel %vm839, %v865, 0.0
        %v876 = vadd.f32 %v874, %v875
        %v877 = vsel %vm839, %v866, 0.0
        %v878 = vadd.f32 %v876, %v877
        %v879 = vsel %vm839, %v867, 0.0
        %v880 = vadd.f32 %v878, %v879
        %v881 = vsel %vm839, %v868, 0.0
        %v882 = vadd.f32 %v880, %v881
        %v883 = vsel %vm839, %v869, 0.0
        %v884 = vadd.f32 %v882, %v883
        %v885 = vrot.slane %v884, 4
        %v886 = vadd.f32 %v884, %v885
        %v887 = vrot.slane %v886, 2
        %v888 = vadd.f32 %v886, %v887
        %v889 = vrot.slane %v888, 1
        %v890 = vadd.f32 %v888, %v889
        %891 = vst.msk [vmem:[%s250 + $0x1] sm:$0x1] %vm307, %v890
        %892 = vst.msk [vmem:[%s255] sm:$0xff] %vm839, %v831
        %893 = vst.msk [vmem:[%s255 + $0x8] sm:$0xff] %vm839, %v832
        %894 = vst.msk [vmem:[%s255 + $0x10] sm:$0xff] %vm839, %v833
        %895 = vst.msk [vmem:[%s255 + $0x18] sm:$0xff] %vm839, %v834
        %896 = vst.msk [vmem:[%s255 + $0x20] sm:$0xff] %vm839, %v835
        %897 = vst.msk [vmem:[%s255 + $0x28] sm:$0xff] %vm839, %v836
        %898 = vst.msk [vmem:[%s255 + $0x30] sm:$0xff] %vm839, %v837
        %899 = vst.msk [vmem:[%s255 + $0x38] sm:$0xff] %vm839, %v838
        %p900 = scmp.lt.s32.totalorder %s23, 1
        %s901 = scalar_select %p900, %s23, 1
        %s902 = smul.addr %s901, 8
        %s903 = smul.addr %s902, 8
        %s904 = scalar_lea.vmem %s4, %s903
        %s905 = sand.u32 %s146, 1
        %s906 = scalar_lea.sflag [#allocation5], %s905
        %s907 = sand.u32 %s146, 1
        %s908 = smul.addr %s907, 2
        %s909 = scalar_lea.vmem [#allocation6], %s908
        // Predicated region
        $region41: #{tpu_custom_call.1} parent=35 // pred_check
          %p910 = pneg %p130
        $region42: #{tpu_custom_call.1} parent=35 // pred_check_branch
          %912 = sbr.rel (%p910) target = $region44
        $region43: #{tpu_custom_call.1} parent=35 // pred_region
          _
        $region44: #{tpu_custom_call.1} parent=35 // pred_fallthru
          _
        // Predicated region
        $region45: #{tpu_custom_call.1} parent=35 // pred_check
          %p913 = pneg %p156
        $region46: #{tpu_custom_call.1} parent=35 // pred_check_branch
          %915 = sbr.rel (%p913) target = $region48
        $region47: #{tpu_custom_call.1} parent=35 // pred_region
          %s917 = ssub.s32 32, 32
          %918 = vsyncadd %s906, %s917
          %s919 = smul.addr %s23, 32
          %s920 = scalar_lea.hbm %s5, %s919
          %s922 = sshll.u32 %s909, 4
          %s923 = int_to_ptr.vmem [resolvable:$true] %s922
          %925 = dma.vmem_to_hbm [thread:$0]  %s923, 32, %s920, %s906
        $region48: #{tpu_custom_call.1} parent=35 // pred_fallthru
          _
      $region36: #{tpu_custom_call.1} parent=5 // pred_fallthru
        _
      %p926 = scmp.le.s32.totalorder 2, %s18
      // Predicated region
      $region49: #{tpu_custom_call.1} parent=5 // pred_check
        %p927 = pneg %p926
      $region50: #{tpu_custom_call.1} parent=5 // pred_check_branch
        %929 = sbr.rel (%p927) target = $region52
      $region51: #{tpu_custom_call.1} parent=5 // pred_region
        %s930 = ssub.s32 %s18, 2
        // Predicated region
        $region53: #{tpu_custom_call.1} parent=51 // pred_check
          %p931 = pneg %p136
        $region54: #{tpu_custom_call.1} parent=51 // pred_check_branch
          %933 = sbr.rel (%p931) target = $region56
        $region55: #{tpu_custom_call.1} parent=51 // pred_region
          %p934 = scmp.lt.s32.totalorder %s24, 1
          %s935 = scalar_select %p934, %s24, 1
          %s936 = smul.addr %s935, 8
          %s937 = smul.addr %s936, 8
          %s938 = scalar_lea.vmem %s4, %s937
        $region56: #{tpu_custom_call.1} parent=51 // pred_fallthru
          _
        // Predicated region
        $region57: #{tpu_custom_call.1} parent=51 // pred_check
          %p939 = pneg %p162
        $region58: #{tpu_custom_call.1} parent=51 // pred_check_branch
          %941 = sbr.rel (%p939) target = $region60
        $region59: #{tpu_custom_call.1} parent=51 // pred_region
          %s942 = sand.u32 %s147, 1
          %s943 = scalar_lea.sflag [#allocation5], %s942
          %s944 = sand.u32 %s147, 1
          %s945 = smul.addr %s944, 2
          %s946 = scalar_lea.vmem [#allocation6], %s945
          %947 = dma.done %s943, 32
        $region60: #{tpu_custom_call.1} parent=51 // pred_fallthru
          _
      $region52: #{tpu_custom_call.1} parent=5 // pred_fallthru
        _
    $region6: #{tpu_custom_call.1} parent=1 // loop_footer
      %s22 = sadd.s32 1, %s18
    $region7: #{tpu_custom_call.1} parent=1 // loop_footer_branch
      %17 = sbr.rel target = $region3
    $region8: #{tpu_custom_call.1} parent=1 // loop_exit
      _
    %948 = vsyncpa [#allocation4], 1
    %s949 = scalar_lea.sflag [#allocation4], 1
    %950 = vsyncpa %s949, 1
    %951 = vsyncpa [#allocation5], 1
    %s952 = scalar_lea.sflag [#allocation5], 1
    %953 = vsyncpa %s952, 1

</llo_original>
